<compile_context>
chip_gen: v6e
topology: v6e:2x2x1
jax: 0.10.0
libtpu: 0.0.40
codegen_flags: <defaults>
</compile_context>

<pallas_src>
import jax
import jax.numpy as jnp
from jax import lax
from jax.experimental import pallas as pl
from jax.experimental.pallas import tpu as pltpu


_LANE = 128


def _round_up(x, m):
    return ((x + m - 1) // m) * m


def _sublane_multiple(dtype):
    itemsize = jnp.dtype(dtype).itemsize
    return max(8, 8 * (4 // max(itemsize, 1)))   # f32:8, bf16:16, int8/fp8:32


def _vmem_caps():
    """Generation-aware (budget, limit) in bytes; safe fallback = 64 MiB."""
    cap = 64 * 1024 * 1024
    try:
        info = pltpu.get_tpu_info()
        cap = int(getattr(info, "vmem_capacity_bytes", cap))
    except Exception:
        pass
    budget = int(cap * 0.6)                      # tile-sizing budget
    limit = min(int(cap * 0.8), 112 * 1024 * 1024)
    return budget, limit


def _make_aggr_kernel(tn, use_scratch, matmul_dtype):
    def kernel(chunk_ref, cnt_ref, xnode_ref, norm_ref, h_ref, out_ref, *scratch):
        # chunk_ref: (nb*K,) int32 SMEM  -- used only by the index_maps
        # cnt_ref:   (nb,)   int32 SMEM  -- valid chunk count per node block
        # xnode_ref: (1, tk) int32       -- sorted edge targets, this chunk
        # norm_ref:  (1, tk) f32         -- per-edge norm, this chunk
        # h_ref:     (tk, td)            -- message features, this chunk
        # out_ref:   (tn, td)            -- output tile for node block i / D tile d
        del chunk_ref
        i = pl.program_id(0)
        k = pl.program_id(2)
        acc_ref = scratch[0] if use_scratch else out_ref

        @pl.when(k == 0)
        def _():
            acc_ref[...] = jnp.zeros_like(acc_ref)

        # Skip chunks beyond this node block's edge range (clamped index_map
        # may revisit a chunk; the guard prevents any double counting).
        @pl.when(k < cnt_ref[i])
        def _():
            mm_dtype = matmul_dtype if matmul_dtype is not None else h_ref.dtype
            node_ids = lax.broadcasted_iota(jnp.int32, (tn, 1), 0) + i * tn
            # norm folded into the mask: scatter-sum with per-edge scaling
            mask = jnp.where(xnode_ref[...] == node_ids,
                             norm_ref[...], jnp.float32(0.0)).astype(mm_dtype)
            h = h_ref[...].astype(mm_dtype)
            acc_ref[...] += jnp.dot(mask, h, preferred_element_type=jnp.float32)

        if use_scratch:
            @pl.when(k == pl.num_programs(2) - 1)
            def _():
                out_ref[...] = acc_ref[...].astype(out_ref.dtype)

    return kernel


def aggr_sum(H, X_node, node_num, norm=None, *, tn=256, tk=512, td=512,
             matmul_dtype=None):
    """Pallas equivalent of AggrSum.forward(H * norm[:,None], X_node, node_num).

    If `norm` is None, plain scatter-sum (original AggrSum semantics).
    `node_num` must be a static Python int (same requirement as before).
    """
    E, D = H.shape
    out_dtype = H.dtype
    node_num = int(node_num)
    n_eff = max(node_num, 1)

    if norm is None:
        norm = jnp.ones((E,), jnp.float32)
    norm = norm.astype(jnp.float32)
    x_node = X_node.astype(jnp.int32)

    sub = _sublane_multiple(out_dtype)
    budget, vmem_limit = _vmem_caps()
    itemsize = jnp.dtype(out_dtype).itemsize
    use_scratch = jnp.dtype(out_dtype) != jnp.dtype(jnp.float32)

    # --- tile sizes (lane/sublane aligned) ---
    D_pad = _round_up(max(D, 1), _LANE)
    td = max(_LANE, min(_round_up(td, _LANE), D_pad))
    while D_pad % td:
        td -= _LANE

    tn_cap = _round_up(n_eff, sub)
    tn_half = _round_up(pl.cdiv(n_eff, 2), sub)      # keep >=2 node blocks
    tn = max(sub, min(_round_up(tn, sub), tn_cap, max(tn_half, sub)))

    tk = max(_LANE, min(_round_up(tk, _LANE), _round_up(max(E, 1), _LANE)))

    def vmem_est(tn_, tk_, td_):
        h_buf = 2 * tk_ * td_ * itemsize            # double-buffered H tiles
        x_buf = 2 * 8 * tk_ * 4                      # X_node tiles
        nrm_buf = 2 * 8 * tk_ * 4                    # norm tiles
        o_buf = 2 * tn_ * td_ * itemsize             # output tiles
        acc = tn_ * td_ * 4 if use_scratch else 0    # f32 accumulator scratch
        work = 2 * tn_ * tk_ * 4 + tn_ * td_ * 4     # mask / matmul working set
        return h_buf + x_buf + nrm_buf + o_buf + acc + work

    while vmem_est(tn, tk, td) > budget and tk > _LANE:          # shrink tk first
        tk = max(_LANE, (tk // 2) // _LANE * _LANE)
    while vmem_est(tn, tk, td) > budget and td > _LANE:          # then td
        td = max(_LANE, (td // 2) // _LANE * _LANE)
        while D_pad % td:
            td -= _LANE
    while vmem_est(tn, tk, td) > budget and tn > sub:            # tn last
        tn = max(sub, (tn // 2) // sub * sub)

    N_pad = _round_up(n_eff, tn)
    E_pad = _round_up(max(E, 1), tk)
    nb = N_pad // tn
    db = D_pad // td
    n_chunks = E_pad // tk

    # --- CSR layout: sort edges by target node, pad lane-dense ---
    order = jnp.argsort(x_node)
    row_s = x_node[order]
    h_s = H[order]
    norm_s = norm[order]

    # padded edges get target N_pad: sorted order preserved, never matched,
    # and excluded from every block's edge range by searchsorted below.
    row_p = jnp.full((E_pad,), N_pad, dtype=jnp.int32).at[:E].set(row_s)
    h_p = jnp.zeros((E_pad, D_pad), H.dtype).at[:E, :D].set(h_s)
    norm_p = jnp.zeros((1, E_pad), jnp.float32).at[0, :E].set(norm_s)
    x2d = row_p.reshape(1, E_pad)

    block_bounds = jnp.arange(nb + 1, dtype=jnp.int32) * tn
    edges_lo = jnp.searchsorted(row_p, block_bounds[:-1]).astype(jnp.int32)
    edges_hi = jnp.searchsorted(row_p, block_bounds[1:]).astype(jnp.int32)
    chunk_lo = edges_lo // tk
    chunk_hi = (edges_hi + tk - 1) // tk
    chunk_cnt = jnp.maximum(chunk_hi - chunk_lo, 0).astype(jnp.int32)

    # static inner-loop extent (requires eager/static node metadata)
    k_steps = max(int(jnp.max(chunk_cnt)), 1)
    K = k_steps
    chunk_idx = jnp.clip(
        chunk_lo[:, None] + jnp.arange(K, dtype=jnp.int32)[None, :],
        0, n_chunks - 1).astype(jnp.int32).reshape(-1)            # (nb*K,)

    kernel = _make_aggr_kernel(tn, use_scratch, matmul_dtype)
    scratch_shapes = [pltpu.VMEM((tn, td), jnp.float32)] if use_scratch else []

    out_padded = pl.pallas_call(
        kernel,
        out_shape=jax.ShapeDtypeStruct((N_pad, D_pad), out_dtype),
        grid_spec=pltpu.PrefetchScalarGridSpec(
            num_scalar_prefetch=2,
            grid=(nb, db, K),
            in_specs=[
                pl.BlockSpec((1, tk), lambda i, d, k, c, n: (0, c[i * K + k])),
                pl.BlockSpec((1, tk), lambda i, d, k, c, n: (0, c[i * K + k])),
                pl.BlockSpec((tk, td), lambda i, d, k, c, n: (c[i * K + k], d)),
            ],
            out_specs=pl.BlockSpec((tn, td), lambda i, d, k, c, n: (i, d)),
            scratch_shapes=scratch_shapes,
        ),
        compiler_params=pltpu.CompilerParams(
            dimension_semantics=("parallel", "parallel", "arbitrary"),
            vmem_limit_bytes=vmem_limit,
        ),
    )(chunk_idx, chunk_cnt, x2d, norm_p, h_p)

    return out_padded[:node_num, :D]


def gcn_conv(x, edge_index, weight, bias, **kwargs):
    """GCNConv.forward: self-loops -> linear -> sym-norm -> Pallas AggrSum."""
    node_num = x.shape[0]
    self_loops = jnp.arange(node_num, dtype=edge_index.dtype)
    ei = jnp.concatenate([edge_index, jnp.stack([self_loops, self_loops])], axis=1)

    x = x @ weight.T + bias                              # nn.Linear
    row, col = ei[0], ei[1]
    deg = jnp.zeros((node_num,), jnp.float32).at[row].add(1.0)   # calDegree
    deg_isqrt = lax.rsqrt(deg)                           # deg >= 1 (self loops)
    norm = deg_isqrt[row] * deg_isqrt[col]
    tar = x[col]                                         # gather only; norm folded into kernel
    return aggr_sum(tar, row, node_num, norm=norm, **kwargs)


def gcn_conv_ref(x, edge_index, weight, bias):
    """Pure-JAX reference, same math as the PyTorch module."""
    node_num = x.shape[0]
    self_loops = jnp.arange(node_num, dtype=edge_index.dtype)
    ei = jnp.concatenate([edge_index, jnp.stack([self_loops, self_loops])], axis=1)
    x = x @ weight.T + bias
    row, col = ei[0], ei[1]
    deg = jnp.zeros((node_num,), jnp.float32).at[row].add(1.0)
    norm = (deg ** -0.5)[row] * (deg ** -0.5)[col]
    tar = norm[:, None] * x[col]
    return jax.ops.segment_sum(tar, row, num_segments=node_num)


if __name__ == "__main__":
    key = jax.random.PRNGKey(0)
    k_x, k_e, k_w, k_b, k_h, k_i, k_h2, k_i2 = jax.random.split(key, 8)

    # GCNConv-sized graph: 16 nodes, 24 directed edges, in=8, out=32.
    N, E_edges, C_in, C_out = 16, 24, 8, 32
    x = jax.random.normal(k_x, (N, C_in), dtype=jnp.float32)
    edge_index = jax.random.randint(k_e, (2, E_edges), 0, N, dtype=jnp.int32)
    weight = jax.random.normal(k_w, (C_out, C_in), dtype=jnp.float32) * 0.1
    bias = jax.random.normal(k_b, (C_out,), dtype=jnp.float32) * 0.1

    out = jax.block_until_ready(gcn_conv(x, edge_index, weight, bias))
    ref = gcn_conv_ref(x, edge_index, weight, bias)
    assert out.shape == (N, C_out)
    assert jnp.allclose(out, ref, atol=1e-4, rtol=1e-4), float(
        jnp.max(jnp.abs(out - ref)))

    # Direct AggrSum check, f32, non-128 D and non-divisible node count.
    E2, D2, N2 = 40, 48, 13
    H = jax.random.normal(k_h, (E2, D2), dtype=jnp.float32)
    X_node = jax.random.randint(k_i, (E2,), 0, N2, dtype=jnp.int32)
    out2 = jax.block_until_ready(aggr_sum(H, X_node, N2))
    ref2 = jax.ops.segment_sum(H, X_node, num_segments=N2)
    assert out2.shape == (N2, D2)
    assert jnp.allclose(out2, ref2, atol=1e-4, rtol=1e-4), float(
        jnp.max(jnp.abs(out2 - ref2)))

    # bf16 path (exercises the f32 scratch accumulator + 16-sublane tn floor).
    E3, D3, N3 = 64, 32, 20
    H3 = jax.random.normal(k_h2, (E3, D3), dtype=jnp.float32).astype(jnp.bfloat16)
    X3 = jax.random.randint(k_i2, (E3,), 0, N3, dtype=jnp.int32)
    out3 = jax.block_until_ready(aggr_sum(H3, X3, N3))
    ref3 = jax.ops.segment_sum(H3.astype(jnp.float32), X3, num_segments=N3)
    assert out3.shape == (N3, D3) and out3.dtype == jnp.bfloat16
    assert jnp.allclose(out3.astype(jnp.float32), ref3, atol=5e-2, rtol=5e-2), float(
        jnp.max(jnp.abs(out3.astype(jnp.float32) - ref3)))

    print("KERNEL_OK")
</pallas_src>

<mosaic_0001>
module attributes {stable_mosaic.version = 11 : i64} {
  func.func @kernel(%arg0: i32, %arg1: i32, %arg2: i32, %arg3: memref<2xi32, #tpu.memory_space<smem>>, %arg4: memref<2xi32, #tpu.memory_space<smem>>, %arg5: memref<1x128xi32, #tpu.memory_space<vmem>>, %arg6: memref<1x128xf32, #tpu.memory_space<vmem>>, %arg7: memref<128x128xf32, #tpu.memory_space<vmem>>, %arg8: memref<8x128xf32, #tpu.memory_space<vmem>>) attributes {dimension_semantics = [#tpu.dimension_semantics<parallel>, #tpu.dimension_semantics<parallel>, #tpu.dimension_semantics<arbitrary>], iteration_bounds = array<i64: 2, 1, 1>, scalar_prefetch = 2 : i64, scratch_operands = 0 : i64, tpu.core_type = #tpu.core_type<tc>, window_params = [{transform_indices = @transform_0, window_bounds = array<i64: 1, 128>}, {transform_indices = @transform_1, window_bounds = array<i64: 1, 128>}, {transform_indices = @transform_2, window_bounds = array<i64: 128, 128>}, {transform_indices = @transform_3, window_bounds = array<i64: 8, 128>}]} {
    %c0_i32 = arith.constant 0 : i32
    %0 = arith.cmpi eq, %arg2, %c0_i32 : i32
    %1 = arith.extui %0 : i1 to i32
    %c0_i32_0 = arith.constant 0 : i32
    %2 = arith.cmpi ne, %1, %c0_i32_0 : i32
    scf.if %2 {
      %cst = arith.constant 0.000000e+00 : f32
      %8 = vector.broadcast %cst : f32 to vector<8x128xf32>
      %c0 = arith.constant 0 : index
      %c0_2 = arith.constant 0 : index
      %9 = vector.load %arg8[%c0, %c0_2] : memref<8x128xf32, #tpu.memory_space<vmem>>, vector<8x128xf32>
      tpu.vector_store %arg8[%c0, %c0_2], %8 {strides = array<i32>} : memref<8x128xf32, #tpu.memory_space<vmem>>, vector<8x128xf32>,
    } else {
    }
    %3 = arith.index_cast %arg0 : i32 to index
    %4 = memref.load %arg4[%3] : memref<2xi32, #tpu.memory_space<smem>>
    %5 = arith.cmpi slt, %arg2, %4 : i32
    %6 = arith.extui %5 : i1 to i32
    %c0_i32_1 = arith.constant 0 : i32
    %7 = arith.cmpi ne, %6, %c0_i32_1 : i32
    scf.if %7 {
      %8 = tpu.iota {dimensions = array<i32: 0>} : vector<8x1xi32>
      %c8_i32 = arith.constant 8 : i32
      %9 = arith.muli %arg0, %c8_i32 : i32
      %10 = vector.broadcast %9 : i32 to vector<8x1xi32>
      %11 = arith.addi %8, %10 : vector<8x1xi32>
      %c0 = arith.constant 0 : index
      %c0_2 = arith.constant 0 : index
      %12 = vector.load %arg5[%c0, %c0_2] : memref<1x128xi32, #tpu.memory_space<vmem>>, vector<1x128xi32>
      %13 = vector.broadcast %12 : vector<1x128xi32> to vector<8x128xi32>
      %14 = vector.broadcast %11 : vector<8x1xi32> to vector<8x128xi32>
      %15 = arith.cmpi eq, %13, %14 : vector<8x128xi32>
      %c0_3 = arith.constant 0 : index
      %c0_4 = arith.constant 0 : index
      %16 = vector.load %arg6[%c0_3, %c0_4] : memref<1x128xf32, #tpu.memory_space<vmem>>, vector<1x128xf32>
      %cst = arith.constant 0.000000e+00 : f32
      %17 = vector.shape_cast %16 : vector<1x128xf32> to vector<1x128xf32>
      %18 = vector.broadcast %17 : vector<1x128xf32> to vector<8x128xf32>
      %19 = vector.broadcast %cst : f32 to vector<8x128xf32>
      %20 = arith.select %15, %18, %19 : vector<8x128xi1>, vector<8x128xf32>
      %c0_5 = arith.constant 0 : index
      %c0_6 = arith.constant 0 : index
      %21 = vector.load %arg7[%c0_5, %c0_6] : memref<128x128xf32, #tpu.memory_space<vmem>>, vector<128x128xf32>
      %c0_7 = arith.constant 0 : index
      %c0_8 = arith.constant 0 : index
      %22 = vector.load %arg8[%c0_7, %c0_8] : memref<8x128xf32, #tpu.memory_space<vmem>>, vector<8x128xf32>
      %cst_9 = arith.constant dense<0.000000e+00> : vector<8x128xf32>
      %23 = tpu.matmul %20, %21, %cst_9 {dimension_numbers = #tpu.dot_dimension_numbers<[1], [0], [0], [1], [0, 0, 1, 1], [], []>} : vector<8x128xf32>, vector<128x128xf32>, vector<8x128xf32> -> vector<8x128xf32>
      %24 = arith.addf %22, %23 : vector<8x128xf32>
      %c0_10 = arith.constant 0 : index
      %c0_11 = arith.constant 0 : index
      %25 = vector.load %arg8[%c0_10, %c0_11] : memref<8x128xf32, #tpu.memory_space<vmem>>, vector<8x128xf32>
      tpu.vector_store %arg8[%c0_10, %c0_11], %24 {strides = array<i32>} : memref<8x128xf32, #tpu.memory_space<vmem>>, vector<8x128xf32>,
    } else {
    }
    return
  }
  func.func @transform_0(%arg0: i32, %arg1: i32, %arg2: i32, %arg3: memref<2xi32, #tpu.memory_space<smem>>, %arg4: memref<2xi32, #tpu.memory_space<smem>>) -> (i32, i32) {
    %c1_i32 = arith.constant 1 : i32
    %0 = arith.muli %arg0, %c1_i32 : i32
    %1 = arith.addi %0, %arg2 : i32
    %2 = arith.index_cast %1 : i32 to index
    %3 = memref.load %arg3[%2] : memref<2xi32, #tpu.memory_space<smem>>
    %c0_i32 = arith.constant 0 : i32
    %c0_i32_0 = arith.constant 0 : i32
    return %c0_i32, %3 : i32, i32
  }
  func.func @transform_1(%arg0: i32, %arg1: i32, %arg2: i32, %arg3: memref<2xi32, #tpu.memory_space<smem>>, %arg4: memref<2xi32, #tpu.memory_space<smem>>) -> (i32, i32) {
    %c1_i32 = arith.constant 1 : i32
    %0 = arith.muli %arg0, %c1_i32 : i32
    %1 = arith.addi %0, %arg2 : i32
    %2 = arith.index_cast %1 : i32 to index
    %3 = memref.load %arg3[%2] : memref<2xi32, #tpu.memory_space<smem>>
    %c0_i32 = arith.constant 0 : i32
    %c0_i32_0 = arith.constant 0 : i32
    return %c0_i32, %3 : i32, i32
  }
  func.func @transform_2(%arg0: i32, %arg1: i32, %arg2: i32, %arg3: memref<2xi32, #tpu.memory_space<smem>>, %arg4: memref<2xi32, #tpu.memory_space<smem>>) -> (i32, i32) {
    %c1_i32 = arith.constant 1 : i32
    %0 = arith.muli %arg0, %c1_i32 : i32
    %1 = arith.addi %0, %arg2 : i32
    %2 = arith.index_cast %1 : i32 to index
    %3 = memref.load %arg3[%2] : memref<2xi32, #tpu.memory_space<smem>>
    %c0_i32 = arith.constant 0 : i32
    return %3, %arg1 : i32, i32
  }
  func.func @transform_3(%arg0: i32, %arg1: i32, %arg2: i32, %arg3: memref<2xi32, #tpu.memory_space<smem>>, %arg4: memref<2xi32, #tpu.memory_space<smem>>) -> (i32, i32) {
    %c0_i32 = arith.constant 0 : i32
    return %arg0, %arg1 : i32, i32
  }
}

</mosaic_0001>

<llo_original>
// kernel: tpu_custom_call.1
$region0: #{tpu_custom_call.1}
  #allocation0 [shape = 'u32[]', space=smem, size = 0x4, offset = 0x4, fixed_abs, tag = 'smem constant byte address 0x4 - core index']
  #allocation1 [shape = 'u32[144,128]{1,0:T(1,128)}', space=vmem, size = 0x12000, scoped, tag = 'internal scratch']
  #allocation2 [shape = 's32[1]{0}', space=sflag, size = 0x4, scoped, tag = 'scoped memory for tpu_custom_call.1']
  #allocation3 [shape = 'u8[512]{0}', space=smem, size = 0x200, scoped, tag = 'prefetched SMEM operand 0']
  #allocation4 [shape = 'u8[512]{0}', space=smem, size = 0x200, scoped, tag = 'prefetched SMEM operand 1']
  %s0 = inlined_call_operand.hbm [shape: s32[2], index: 0, kind: input, shape index: {}]
  %s1 = inlined_call_operand.vmem [shape: s32[2], index: 1, kind: input, shape index: {}]
  %s2 = inlined_call_operand.vmem [shape: s32[1,128], index: 2, kind: input, shape index: {}]
  %s3 = inlined_call_operand.vmem [shape: f32[1,128], index: 3, kind: input, shape index: {}]
  %s4 = inlined_call_operand.hbm [shape: f32[128,128], index: 4, kind: input, shape index: {}]
  %s5 = inlined_call_operand.hbm [shape: f32[16,128], index: 5, kind: output, shape index: {}]
  %s6 = sld [smem:[#allocation0]]
  $region57: #{tpu_custom_call.1} parent=0
    _
  %s8 = ssub.s32 1, %s6
  %s9 = scalar_select 0, %s8, %s6
  %11 = dma.hbm_to_smem %s0, 16, [#allocation3], [#allocation2]
  %s12 = sshll.u32 %s1, 4
  %s13 = int_to_ptr.vmem [resolvable:$true] %s12
  %15 = dma.vmem_to_smem %s13, 16, [#allocation4], [#allocation2]
  %16 = dma.done [#allocation2], 32
  %17 = sfence
  $region1: #{tpu_custom_call.1} parent=0
    #allocation5 [shape = 'u8[131072]{0}', space=vmem, size = 0x20000, scoped, tag = 'input window, operand 4']
    #allocation6 [shape = 's32[2]{0}', space=sflag, size = 0x8, scoped, tag = 'scoped memory for tpu_custom_call.1']
    #allocation7 [shape = 's32[2]{0}', space=sflag, size = 0x8, scoped, tag = 'scoped memory for tpu_custom_call.1']
    #allocation8 [shape = 'u8[8192]{0}', space=vmem, size = 0x2000, scoped, tag = 'output window, operand 0']
    %18 = vsyncpa [#allocation6], 0
    %s19 = scalar_lea.sflag [#allocation6], 1
    %20 = vsyncpa %s19, 0
    %21 = vsyncpa [#allocation7], 0
    %s22 = scalar_lea.sflag [#allocation7], 1
    %23 = vsyncpa %s22, 0
    loop: start=0, step=1, limit=4
    $region2: #{tpu_custom_call.1} parent=1 // loop_pre_header
      _
    $region3: #{tpu_custom_call.1} parent=1 // loop_header
      %s25 = sphi 0, %s29
      %p26 = scmp.ge.s32.totalorder %s25, 4
      %s32 = sphi 0, %s51
      %s33 = sphi 0, %s47
      %s34 = sphi 0, %s43
      %s35 = sphi 0, %s32
      %s36 = sphi 0, %s33
      %s37 = sphi 0, %s34
      %s38 = sphi 0, %s35
      %s39 = sphi 0, %s36
      %s40 = sphi 0, %s37
      %s58 = sphi 0, %s60
      %s61 = sphi 0, %s58
      %s62 = sphi 0, %s61
      %s78 = sphi 0, %s62
      %s88 = sphi 0, %s90
      %s91 = sphi 0, %s88
      %s92 = sphi 0, %s91
      %s108 = sphi 0, %s92
      %s120 = sphi 0, %s122
      %s123 = sphi 0, %s120
      %s124 = sphi 0, %s123
      %s140 = sphi 0, %s124
      %s148 = sphi 0, %s150
      %s151 = sphi 0, %s148
      %s152 = sphi 0, %s151
      %s168 = sphi 0, %s152
    $region4: #{tpu_custom_call.1} parent=1 // loop_header_branch
      %28 = sbr.rel (%p26) target = $region8
    $region5: #{tpu_custom_call.1} parent=1 // loop_body
      %s30 = ssub.s32 %s25, 1
      %s31 = ssub.s32 %s25, 2
      %s41 = sadd.s32 1, %s34
      %p42 = scmp.ge.s32.totalorder %s41, 1
      %s43 = scalar_select %p42, 0, %s41
      %s44 = sadd.s32 1, %s33
      %s45 = scalar_select %p42, %s44, %s33
      %p46 = scmp.ge.s32.totalorder %s45, 1
      %s47 = scalar_select %p46, 0, %s45
      %s48 = sadd.s32 1, %s32
      %s49 = scalar_select %p46, %s48, %s32
      %p50 = scmp.ge.s32.totalorder %s49, 2
      %s51 = scalar_select %p50, 0, %s49
      %s52 = sadd.s32 %s32, %s34
      %s53 = sld [smem:[#allocation3 + %s52]]
      %s54 = sadd.s32 %s51, %s43
      %s55 = sld [smem:[#allocation3 + %s54]]
      %s56 = ssub.s32 %s53, %s55
      %p57 = scmp.eq.s32.totalorder %s56, 0
      %s59 = sadd.s32 %s58, 1
      %s60 = scalar_select %p57, %s58, %s59
      %p63 = pneg %p57
      %p64 = scmp.eq.s32.totalorder %s25, 1
      %p65 = por %p63, %p64
      %p66 = scmp.ne.s32.totalorder %s58, %s61
      %p67 = scmp.eq.s32.totalorder %s25, 0
      %p68 = por %p66, %p67
      %p69 = scmp.ne.s32.totalorder %s58, %s61
      %p70 = scmp.eq.s32.totalorder %s30, 1
      %p71 = por %p69, %p70
      %p72 = scmp.ne.s32.totalorder %s61, %s62
      %p73 = scmp.eq.s32.totalorder %s30, 0
      %p74 = por %p72, %p73
      %p75 = scmp.ne.s32.totalorder %s61, %s62
      %p76 = scmp.eq.s32.totalorder %s31, 1
      %p77 = por %p75, %p76
      %p79 = scmp.ne.s32.totalorder %s62, %s78
      %p80 = scmp.eq.s32.totalorder %s31, 0
      %p81 = por %p79, %p80
      %s82 = sadd.s32 %s32, %s34
      %s83 = sld [smem:[#allocation3 + %s82]]
      %s84 = sadd.s32 %s51, %s43
      %s85 = sld [smem:[#allocation3 + %s84]]
      %s86 = ssub.s32 %s83, %s85
      %p87 = scmp.eq.s32.totalorder %s86, 0
      %s89 = sadd.s32 %s88, 1
      %s90 = scalar_select %p87, %s88, %s89
      %p93 = pneg %p87
      %p94 = scmp.eq.s32.totalorder %s25, 1
      %p95 = por %p93, %p94
      %p96 = scmp.ne.s32.totalorder %s88, %s91
      %p97 = scmp.eq.s32.totalorder %s25, 0
      %p98 = por %p96, %p97
      %p99 = scmp.ne.s32.totalorder %s88, %s91
      %p100 = scmp.eq.s32.totalorder %s30, 1
      %p101 = por %p99, %p100
      %p102 = scmp.ne.s32.totalorder %s91, %s92
      %p103 = scmp.eq.s32.totalorder %s30, 0
      %p104 = por %p102, %p103
      %p105 = scmp.ne.s32.totalorder %s91, %s92
      %p106 = scmp.eq.s32.totalorder %s31, 1
      %p107 = por %p105, %p106
      %p109 = scmp.ne.s32.totalorder %s92, %s108
      %p110 = scmp.eq.s32.totalorder %s31, 0
      %p111 = por %p109, %p110
      %s112 = sadd.s32 %s32, %s34
      %s113 = sld [smem:[#allocation3 + %s112]]
      %s114 = sadd.s32 %s51, %s43
      %s115 = sld [smem:[#allocation3 + %s114]]
      %s116 = ssub.s32 %s113, %s115
      %s117 = ssub.s32 %s33, %s47
      %s118 = sor.u32 %s116, %s117
      %p119 = scmp.eq.s32.totalorder %s118, 0
      %s121 = sadd.s32 %s120, 1
      %s122 = scalar_select %p119, %s120, %s121
      %p125 = pneg %p119
      %p126 = scmp.eq.s32.totalorder %s25, 1
      %p127 = por %p125, %p126
      %p128 = scmp.ne.s32.totalorder %s120, %s123
      %p129 = scmp.eq.s32.totalorder %s25, 0
      %p130 = por %p128, %p129
      %p131 = scmp.ne.s32.totalorder %s120, %s123
      %p132 = scmp.eq.s32.totalorder %s30, 1
      %p133 = por %p131, %p132
      %p134 = scmp.ne.s32.totalorder %s123, %s124
      %p135 = scmp.eq.s32.totalorder %s30, 0
      %p136 = por %p134, %p135
      %p137 = scmp.ne.s32.totalorder %s123, %s124
      %p138 = scmp.eq.s32.totalorder %s31, 1
      %p139 = por %p137, %p138
      %p141 = scmp.ne.s32.totalorder %s124, %s140
      %p142 = scmp.eq.s32.totalorder %s31, 0
      %p143 = por %p141, %p142
      %s144 = ssub.s32 %s32, %s51
      %s145 = ssub.s32 %s33, %s47
      %s146 = sor.u32 %s144, %s145
      %p147 = scmp.eq.s32.totalorder %s146, 0
      %s149 = sadd.s32 %s148, 1
      %s150 = scalar_select %p147, %s148, %s149
      %p153 = pneg %p147
      %p154 = scmp.eq.s32.totalorder %s25, 1
      %p155 = por %p153, %p154
      %p156 = scmp.ne.s32.totalorder %s148, %s151
      %p157 = scmp.eq.s32.totalorder %s25, 0
      %p158 = por %p156, %p157
      %p159 = scmp.ne.s32.totalorder %s148, %s151
      %p160 = scmp.eq.s32.totalorder %s30, 1
      %p161 = por %p159, %p160
      %p162 = scmp.ne.s32.totalorder %s151, %s152
      %p163 = scmp.eq.s32.totalorder %s30, 0
      %p164 = por %p162, %p163
      %p165 = scmp.ne.s32.totalorder %s151, %s152
      %p166 = scmp.eq.s32.totalorder %s31, 1
      %p167 = por %p165, %p166
      %p169 = scmp.ne.s32.totalorder %s152, %s168
      %p170 = scmp.eq.s32.totalorder %s31, 0
      %p171 = por %p169, %p170
      %p172 = scmp.le.s32.totalorder 1, %s25
      %p173 = scmp.lt.s32.totalorder %s25, 3
      %p174 = pnand %p172, %p173
      %p175 = pneg %p174
      // Predicated region
      $region9: #{tpu_custom_call.1} parent=5 // pred_check
        _
      $region10: #{tpu_custom_call.1} parent=5 // pred_check_branch
        %177 = sbr.rel (%p174) target = $region12
      $region11: #{tpu_custom_call.1} parent=5 // pred_region
        %s178 = ssub.s32 %s25, 1
      $region12: #{tpu_custom_call.1} parent=5 // pred_fallthru
        _
      %p179 = scmp.lt.s32.totalorder %s25, 2
      // Predicated region
      $region13: #{tpu_custom_call.1} parent=5 // pred_check
        %p180 = pneg %p179
      $region14: #{tpu_custom_call.1} parent=5 // pred_check_branch
        %182 = sbr.rel (%p180) target = $region16
      $region15: #{tpu_custom_call.1} parent=5 // pred_region
        // Predicated region
        $region17: #{tpu_custom_call.1} parent=15 // pred_check
          %p183 = pneg %p68
        $region18: #{tpu_custom_call.1} parent=15 // pred_check_branch
          %185 = sbr.rel (%p183) target = $region20
        $region19: #{tpu_custom_call.1} parent=15 // pred_region
          %s186 = sadd.s32 %s32, %s34
          %s187 = sld [smem:[#allocation3 + %s186]]
          %p188 = scmp.lt.s32.totalorder %s187, 0
          %s189 = scalar_select %p188, %s187, 0
          %s190 = scalar_lea.vmem %s2, %s189
          %s191 = sadd.s32 %s32, %s34
          %s192 = sld [smem:[#allocation3 + %s191]]
        $region20: #{tpu_custom_call.1} parent=15 // pred_fallthru
          _
        // Predicated region
        $region21: #{tpu_custom_call.1} parent=15 // pred_check
          %p193 = pneg %p98
        $region22: #{tpu_custom_call.1} parent=15 // pred_check_branch
          %195 = sbr.rel (%p193) target = $region24
        $region23: #{tpu_custom_call.1} parent=15 // pred_region
          %s196 = sadd.s32 %s32, %s34
          %s197 = sld [smem:[#allocation3 + %s196]]
          %p198 = scmp.lt.s32.totalorder %s197, 0
          %s199 = scalar_select %p198, %s197, 0
          %s200 = scalar_lea.vmem %s3, %s199
          %s201 = sadd.s32 %s32, %s34
          %s202 = sld [smem:[#allocation3 + %s201]]
        $region24: #{tpu_custom_call.1} parent=15 // pred_fallthru
          _
        // Predicated region
        $region25: #{tpu_custom_call.1} parent=15 // pred_check
          %p203 = pneg %p130
        $region26: #{tpu_custom_call.1} parent=15 // pred_check_branch
          %205 = sbr.rel (%p203) target = $region28
        $region27: #{tpu_custom_call.1} parent=15 // pred_region
          %s206 = sand.u32 %s120, 1
          %s207 = scalar_lea.sflag [#allocation6], %s206
          %s208 = sand.u32 %s120, 1
          %s209 = smul.addr %s208, 128
          %s210 = scalar_lea.vmem [#allocation5], %s209
          %s211 = sadd.s32 %s32, %s34
          %s212 = sld [smem:[#allocation3 + %s211]]
          %s213 = smul.u32 16, %s212
          %s215 = ssub.s32 2048, 2048
          %216 = vsyncadd %s207, %s215
          %s217 = sadd.s32 %s33, %s213
          %s218 = smul.addr %s217, 128
          %s219 = scalar_lea.hbm %s4, %s218
          %s220 = sshll.u32 %s210, 4
          %s221 = int_to_ptr.vmem [resolvable:$true] %s220
          %226 = dma.hbm_to_vmem [thread:$0]  %s219, 2048, %s221, %s207, 128, 128, 8
        $region28: #{tpu_custom_call.1} parent=15 // pred_fallthru
          _
      $region16: #{tpu_custom_call.1} parent=5 // pred_fallthru
        _
      %p227 = scmp.le.s32.totalorder 1, %s25
      %p228 = scmp.lt.s32.totalorder %s25, 3
      %p229 = pnand %p227, %p228
      %p230 = pneg %p229
      // Predicated region
      $region29: #{tpu_custom_call.1} parent=5 // pred_check
        _
      $region30: #{tpu_custom_call.1} parent=5 // pred_check_branch
        %232 = sbr.rel (%p229) target = $region32
      $region31: #{tpu_custom_call.1} parent=5 // pred_region
        %s233 = ssub.s32 %s25, 1
        %s234 = sand.u32 %s123, 1
        %s235 = scalar_lea.sflag [#allocation6], %s234
        %s236 = sand.u32 %s123, 1
        %s237 = smul.addr %s236, 128
        %s238 = scalar_lea.vmem [#allocation5], %s237
        // Predicated region
        $region33: #{tpu_custom_call.1} parent=31 // pred_check
          %p239 = pneg %p136
        $region34: #{tpu_custom_call.1} parent=31 // pred_check_branch
          %241 = sbr.rel (%p239) target = $region36
        $region35: #{tpu_custom_call.1} parent=31 // pred_region
          %242 = dma.done %s235, 2048
        $region36: #{tpu_custom_call.1} parent=31 // pred_fallthru
          _
        %s243 = sadd.s32 %s35, %s37
        %s244 = sld [smem:[#allocation3 + %s243]]
        %p245 = scmp.lt.s32.totalorder %s244, 0
        %s246 = scalar_select %p245, %s244, 0
        %s247 = scalar_lea.vmem %s2, %s246
        %p248 = pneg %p74
        %p249 = pneg %p71
        %s250 = sadd.s32 %s35, %s37
        %s251 = sld [smem:[#allocation3 + %s250]]
        %p252 = scmp.lt.s32.totalorder %s251, 0
        %s253 = scalar_select %p252, %s251, 0
        %s254 = scalar_lea.vmem %s3, %s253
        %p255 = pneg %p104
        %p256 = pneg %p101
        %s257 = sand.u32 %s123, 1
        %s258 = scalar_lea.sflag [#allocation6], %s257
        %s259 = sand.u32 %s123, 1
        %s260 = smul.addr %s259, 128
        %s261 = scalar_lea.vmem [#allocation5], %s260
        %p262 = pneg %p136
        %p263 = pneg %p133
        %p264 = pneg %p164
        %p265 = pneg %p161
        %s266 = sand.u32 %s151, 1
        %s267 = scalar_lea.sflag [#allocation7], %s266
        %s268 = sand.u32 %s151, 1
        %s269 = smul.addr %s268, 8
        %s270 = scalar_lea.vmem [#allocation8], %s269
        %s271 = sadd.s32 %s35, %s37
        %s272 = sld [smem:[#allocation3 + %s271]]
        %p273 = scmp.lt.s32.totalorder %s272, 0
        %s274 = scalar_select %p273, %s272, 0
        %s275 = scalar_lea.vmem %s2, %s274
        %s276 = sadd.s32 %s35, %s37
        %s277 = sld [smem:[#allocation3 + %s276]]
        %s278 = sadd.s32 %s35, %s37
        %s279 = sld [smem:[#allocation3 + %s278]]
        %p280 = scmp.lt.s32.totalorder %s279, 0
        %s281 = scalar_select %p280, %s279, 0
        %s282 = scalar_lea.vmem %s3, %s281
        %s283 = sadd.s32 %s35, %s37
        %s284 = sld [smem:[#allocation3 + %s283]]
        %s285 = sadd.s32 %s35, %s37
        %s286 = sld [smem:[#allocation3 + %s285]]
        %s287 = smul.u32 16, %s286
        %p288 = scmp.eq.s32.totalorder %s37, 0
        // Predicated region
        $region37: #{tpu_custom_call.1} parent=31 // pred_check
          %p289 = pneg %p288
        $region38: #{tpu_custom_call.1} parent=31 // pred_check_branch
          %291 = sbr.rel (%p289) target = $region40
        $region39: #{tpu_custom_call.1} parent=31 // pred_region
          %292 = vst [vmem:[%s270] sm:$0xff] 0.0
        $region40: #{tpu_custom_call.1} parent=31 // pred_fallthru
          _
        %s293 = sld [smem:[#allocation4 + %s35]]
        %p294 = scmp.lt.s32.totalorder %s37, %s293
        // Predicated region
        $region41: #{tpu_custom_call.1} parent=31 // pred_check
          %p295 = pneg %p294
        $region42: #{tpu_custom_call.1} parent=31 // pred_check_branch
          %297 = sbr.rel (%p295) target = $region44
        $region43: #{tpu_custom_call.1} parent=31 // pred_region
          %v298 = vlaneseq
          %v299 = vshrl.u32 %v298, 7
          %s300 = smul.u32 %s35, 8
          %v301 = vstv %s300
          %v302 = vadd.s32 %v299, %v301
          %v303 = vld [vmem:[%s275] sm:$0x1]
          %v304 = vlaneseq
          %v305 = vshrl.u32 %v304, 7
          %v306 = vsub.s32 0, %v305
          %v307 = vrot.slane %v303, %v306
          %vm308 = vcmp.eq.s32.totalorder %v307, %v302
          %v309 = vld [vmem:[%s282] sm:$0x1]
          %v311 = vlaneseq
          %v312 = vshrl.u32 %v311, 7
          %v313 = vsub.s32 0, %v312
          %v314 = vrot.slane %v309, %v313
          %v316 = vsel %vm308, %v314, 0.0
          %v317 = vld [vmem:[%s238] sm:$0xff]
          %v318 = vld [vmem:[%s238 + $0x8] sm:$0xff]
          %v319 = vld [vmem:[%s238 + $0x10] sm:$0xff]
          %v320 = vld [vmem:[%s238 + $0x18] sm:$0xff]
          %v321 = vld [vmem:[%s238 + $0x20] sm:$0xff]
          %v322 = vld [vmem:[%s238 + $0x28] sm:$0xff]
          %v323 = vld [vmem:[%s238 + $0x30] sm:$0xff]
          %v324 = vld [vmem:[%s238 + $0x38] sm:$0xff]
          %v325 = vld [vmem:[%s238 + $0x40] sm:$0xff]
          %v326 = vld [vmem:[%s238 + $0x48] sm:$0xff]
          %v327 = vld [vmem:[%s238 + $0x50] sm:$0xff]
          %v328 = vld [vmem:[%s238 + $0x58] sm:$0xff]
          %v329 = vld [vmem:[%s238 + $0x60] sm:$0xff]
          %v330 = vld [vmem:[%s238 + $0x68] sm:$0xff]
          %v331 = vld [vmem:[%s238 + $0x70] sm:$0xff]
          %v332 = vld [vmem:[%s238 + $0x78] sm:$0xff]
          %v333 = vld [vmem:[%s270] sm:$0xff]
          %334 = vmatprep.subr.mxu0 0.0
          %335 = vmatpush1.msra.mxu0 %v332
          %336 = vmatprep.subr.mxu0 0.0
          %337 = vmatpush1.msra.mxu0 %v331
          %338 = vmatprep.subr.mxu0 0.0
          %339 = vmatpush1.msra.mxu0 %v330
          %340 = vmatprep.subr.mxu0 0.0
          %341 = vmatpush1.msra.mxu0 %v329
          %342 = vmatprep.subr.mxu0 0.0
          %343 = vmatpush1.msra.mxu0 %v328
          %344 = vmatprep.subr.mxu0 0.0
          %345 = vmatpush1.msra.mxu0 %v327
          %346 = vmatprep.subr.mxu0 0.0
          %347 = vmatpush1.msra.mxu0 %v326
          %348 = vmatprep.subr.mxu0 0.0
          %349 = vmatpush1.msra.mxu0 %v325
          %350 = vmatprep.subr.mxu0 0.0
          %351 = vmatpush1.msra.mxu0 %v324
          %352 = vmatprep.subr.mxu0 0.0
          %353 = vmatpush1.msra.mxu0 %v323
          %354 = vmatprep.subr.mxu0 0.0
          %355 = vmatpush1.msra.mxu0 %v322
          %356 = vmatprep.subr.mxu0 0.0
          %357 = vmatpush1.msra.mxu0 %v321
          %358 = vmatprep.subr.mxu0 0.0
          %359 = vmatpush1.msra.mxu0 %v320
          %360 = vmatprep.subr.mxu0 0.0
          %361 = vmatpush1.msra.mxu0 %v319
          %362 = vmatprep.subr.mxu0 0.0
          %363 = vmatpush1.msra.mxu0 %v318
          %364 = vmatprep.subr.mxu0 0.0
          %365 = vmatpush1.msra.mxu0 %v317
          %366 = vmatprep.subr.mxu0 0.0
          %367 = vmatpush2.msra.mxu0 0.0
          %368 = vmatprep.subr.mxu0 0.0
          %369 = vmatpush2.msra.mxu0 0.0
          %370 = vmatprep.subr.mxu0 0.0
          %371 = vmatpush2.msra.mxu0 0.0
          %372 = vmatprep.subr.mxu0 0.0
          %373 = vmatpush2.msra.mxu0 0.0
          %374 = vmatprep.subr.mxu0 0.0
          %375 = vmatpush2.msra.mxu0 0.0
          %376 = vmatprep.subr.mxu0 0.0
          %377 = vmatpush2.msra.mxu0 0.0
          %378 = vmatprep.subr.mxu0 0.0
          %379 = vmatpush2.msra.mxu0 0.0
          %380 = vmatprep.subr.mxu0 0.0
          %381 = vmatpush2.msra.mxu0 0.0
          %382 = vmatprep.subr.mxu0 0.0
          %383 = vmatpush2.msra.mxu0 0.0
          %384 = vmatprep.subr.mxu0 0.0
          %385 = vmatpush2.msra.mxu0 0.0
          %386 = vmatprep.subr.mxu0 0.0
          %387 = vmatpush2.msra.mxu0 0.0
          %388 = vmatprep.subr.mxu0 0.0
          %389 = vmatpush2.msra.mxu0 0.0
          %390 = vmatprep.subr.mxu0 0.0
          %391 = vmatpush2.msra.mxu0 0.0
          %392 = vmatprep.subr.mxu0 0.0
          %393 = vmatpush2.msra.mxu0 0.0
          %394 = vmatprep.subr.mxu0 0.0
          %395 = vmatpush2.msra.mxu0 0.0
          %396 = vmatprep.subr.mxu0 0.0
          %397 = vmatpush2.msra.mxu0 0.0
          %398 = vmatprep.mubr.f32.mxu0 0.0
          %399 = vmatmul.mubr.f32.gmra.mxu0 %v316
          %v400 = vpop.f32.mrf.mxu0
          %v401 = vadd.f32 0.0, %v400
          %v402 = vpop.f32.mrf.mxu0
          %403 = vdwg.mxu0
          %v404 = vadd.f32 %v333, %v401
          %405 = vst [vmem:[%s270] sm:$0xff] %v404
        $region44: #{tpu_custom_call.1} parent=31 // pred_fallthru
          _
        %s406 = sand.u32 %s151, 1
        %s407 = scalar_lea.sflag [#allocation7], %s406
        %s408 = sand.u32 %s151, 1
        %s409 = smul.addr %s408, 8
        %s410 = scalar_lea.vmem [#allocation8], %s409
        // Predicated region
        $region45: #{tpu_custom_call.1} parent=31 // pred_check
          %p411 = pneg %p161
        $region46: #{tpu_custom_call.1} parent=31 // pred_check_branch
          %413 = sbr.rel (%p411) target = $region48
        $region47: #{tpu_custom_call.1} parent=31 // pred_region
          %s415 = ssub.s32 128, 128
          %416 = vsyncadd %s407, %s415
          %s417 = sadd.s32 %s36, %s35
          %s418 = smul.addr %s417, 128
          %s419 = scalar_lea.hbm %s5, %s418
          %s421 = sshll.u32 %s410, 4
          %s422 = int_to_ptr.vmem [resolvable:$true] %s421
          %424 = dma.vmem_to_hbm [thread:$0]  %s422, 128, %s419, %s407
        $region48: #{tpu_custom_call.1} parent=31 // pred_fallthru
          _
      $region32: #{tpu_custom_call.1} parent=5 // pred_fallthru
        _
      %p425 = scmp.le.s32.totalorder 2, %s25
      // Predicated region
      $region49: #{tpu_custom_call.1} parent=5 // pred_check
        %p426 = pneg %p425
      $region50: #{tpu_custom_call.1} parent=5 // pred_check_branch
        %428 = sbr.rel (%p426) target = $region52
      $region51: #{tpu_custom_call.1} parent=5 // pred_region
        %s429 = ssub.s32 %s25, 2
        // Predicated region
        $region53: #{tpu_custom_call.1} parent=51 // pred_check
          %p430 = pneg %p167
        $region54: #{tpu_custom_call.1} parent=51 // pred_check_branch
          %432 = sbr.rel (%p430) target = $region56
        $region55: #{tpu_custom_call.1} parent=51 // pred_region
          %s433 = sand.u32 %s152, 1
          %s434 = scalar_lea.sflag [#allocation7], %s433
          %s435 = sand.u32 %s152, 1
          %s436 = smul.addr %s435, 8
          %s437 = scalar_lea.vmem [#allocation8], %s436
          %438 = dma.done %s434, 128
        $region56: #{tpu_custom_call.1} parent=51 // pred_fallthru
          _
      $region52: #{tpu_custom_call.1} parent=5 // pred_fallthru
        _
    $region6: #{tpu_custom_call.1} parent=1 // loop_footer
      %s29 = sadd.s32 1, %s25
    $region7: #{tpu_custom_call.1} parent=1 // loop_footer_branch
      %24 = sbr.rel target = $region3
    $region8: #{tpu_custom_call.1} parent=1 // loop_exit
      _
    %439 = vsyncpa [#allocation6], 1
    %s440 = scalar_lea.sflag [#allocation6], 1
    %441 = vsyncpa %s440, 1
    %442 = vsyncpa [#allocation7], 1
    %s443 = scalar_lea.sflag [#allocation7], 1
    %444 = vsyncpa %s443, 1

</llo_original>
